<compile_context>
chip_gen: v6e
topology: v6e:2x2x1
jax: 0.10.0
libtpu: 0.0.40
codegen_flags: <defaults>
</compile_context>

<pallas_src>
import jax
import jax.numpy as jnp
from jax.experimental import pallas as pl
from jax.experimental.pallas import tpu as pltpu

_LANE = 128      # vreg lane width
_SUBLANE = 8     # f32 sublane count


def _complex_relu_kernel(xr_ref, xi_ref, or_ref, oi_ref):
    # Pure elementwise VPU work on the current (rb, 128) tiles.
    or_ref[...] = jnp.maximum(xr_ref[...], 0.0)
    oi_ref[...] = jnp.maximum(xi_ref[...], 0.0)


def complex_relu(x, *, row_block=4096):
    """ComplexReLU: complex(relu(x.real), relu(x.imag)) for any-rank complex x."""
    if x.dtype == jnp.complex128:
        # TPU has no complex128 support; compute in complex64.
        x = x.astype(jnp.complex64)
    assert jnp.iscomplexobj(x), "ComplexReLU expects a complex input"
    orig_shape = x.shape

    # TODO(synk): lax.bitcast_convert_type rejects complex dtypes, so a
    # zero-copy complex64<->f32 interleaved view is not available; we extract
    # the planes with lax.real/lax.imag (one HBM pass each way) instead.
    xr = jax.lax.real(x)   # f32, no astype needed
    xi = jax.lax.imag(x)

    n = xr.size
    rem = (-n) % _LANE     # pad only the tail to a full 128-lane row (<=127 elems)
    rows = (n + rem) // _LANE

    def to2d(v):
        v = v.reshape(-1)
        if rem:
            v = jnp.pad(v, (0, rem))   # relu(0) == 0, harmless
        return v.reshape(rows, _LANE)  # free, layout-preserving reshape

    xr2, xi2 = to2d(xr), to2d(xi)

    # Row block: biggest (8,128)-aligned tile <= row_block, or the full array.
    if rows <= row_block:
        rb = rows
    else:
        rb = max(_SUBLANE, (row_block // _SUBLANE) * _SUBLANE)
    grid = (pl.cdiv(rows, rb),)        # partial final block -> masked writeback

    spec = pl.BlockSpec((rb, _LANE), lambda i: (i, 0))

    yr2, yi2 = pl.pallas_call(
        _complex_relu_kernel,
        out_shape=(jax.ShapeDtypeStruct((rows, _LANE), jnp.float32),
                   jax.ShapeDtypeStruct((rows, _LANE), jnp.float32)),
        grid=grid,
        in_specs=[spec, spec],
        out_specs=(spec, spec),
        input_output_aliases={0: 0, 1: 1},
        compiler_params=pltpu.CompilerParams(
            dimension_semantics=("parallel",),
            vmem_limit_bytes=32 * 1024 * 1024,
        ),
    )(xr2, xi2)

    def back(v):
        v = v.reshape(-1)
        if rem:
            v = v[:n]
        return v.reshape(orig_shape)

    return jax.lax.complex(back(yr2), back(yi2))


def _reference(x):
    return jax.lax.complex(jnp.maximum(jnp.real(x), 0.0),
                           jnp.maximum(jnp.imag(x), 0.0))


if __name__ == "__main__":
    key = jax.random.PRNGKey(0)
    k1, k2 = jax.random.split(key)

    N, C, H, W = 2, 4, 16, 16
    x_real = jax.random.normal(k1, (N, C, H, W), dtype=jnp.float32)
    x_imag = jax.random.normal(k2, (N, C, H, W), dtype=jnp.float32)
    x = jax.lax.complex(x_real, x_imag)

    out = jax.jit(complex_relu)(x)
    out = jax.block_until_ready(out)

    ref = _reference(x)
    assert out.shape == (N, C, H, W) and out.dtype == jnp.complex64
    assert jnp.array_equal(jnp.real(out), jnp.real(ref))
    assert jnp.array_equal(jnp.imag(out), jnp.imag(ref))

    print("KERNEL_OK")
</pallas_src>

<mosaic_0001>
module attributes {stable_mosaic.version = 11 : i64} {
  func.func @_complex_relu_kernel(%arg0: i32, %arg1: memref<16x128xf32, #tpu.memory_space<vmem>>, %arg2: memref<16x128xf32, #tpu.memory_space<vmem>>, %arg3: memref<16x128xf32, #tpu.memory_space<vmem>>, %arg4: memref<16x128xf32, #tpu.memory_space<vmem>>) attributes {dimension_semantics = [#tpu.dimension_semantics<parallel>], iteration_bounds = array<i64: 1>, scalar_prefetch = 0 : i64, scratch_operands = 0 : i64, tpu.core_type = #tpu.core_type<tc>, window_params = [{transform_indices = @transform_0, window_bounds = array<i64: 16, 128>}, {transform_indices = @transform_1, window_bounds = array<i64: 16, 128>}, {transform_indices = @transform_2, window_bounds = array<i64: 16, 128>}, {transform_indices = @transform_3, window_bounds = array<i64: 16, 128>}]} {
    %c0 = arith.constant 0 : index
    %c0_0 = arith.constant 0 : index
    %0 = vector.load %arg1[%c0, %c0_0] : memref<16x128xf32, #tpu.memory_space<vmem>>, vector<16x128xf32>
    %cst = arith.constant 0.000000e+00 : f32
    %1 = vector.broadcast %cst : f32 to vector<16x128xf32>
    %2 = arith.maximumf %0, %1 : vector<16x128xf32>
    %c0_1 = arith.constant 0 : index
    %c0_2 = arith.constant 0 : index
    %3 = vector.load %arg3[%c0_1, %c0_2] : memref<16x128xf32, #tpu.memory_space<vmem>>, vector<16x128xf32>
    tpu.vector_store %arg3[%c0_1, %c0_2], %2 {strides = array<i32>} : memref<16x128xf32, #tpu.memory_space<vmem>>, vector<16x128xf32>,
    %c0_3 = arith.constant 0 : index
    %c0_4 = arith.constant 0 : index
    %4 = vector.load %arg2[%c0_3, %c0_4] : memref<16x128xf32, #tpu.memory_space<vmem>>, vector<16x128xf32>
    %cst_5 = arith.constant 0.000000e+00 : f32
    %5 = vector.broadcast %cst_5 : f32 to vector<16x128xf32>
    %6 = arith.maximumf %4, %5 : vector<16x128xf32>
    %c0_6 = arith.constant 0 : index
    %c0_7 = arith.constant 0 : index
    %7 = vector.load %arg4[%c0_6, %c0_7] : memref<16x128xf32, #tpu.memory_space<vmem>>, vector<16x128xf32>
    tpu.vector_store %arg4[%c0_6, %c0_7], %6 {strides = array<i32>} : memref<16x128xf32, #tpu.memory_space<vmem>>, vector<16x128xf32>,
    return
  }
  func.func @transform_0(%arg0: i32) -> (i32, i32) {
    %c0_i32 = arith.constant 0 : i32
    %c0_i32_0 = arith.constant 0 : i32
    return %arg0, %c0_i32 : i32, i32
  }
  func.func @transform_1(%arg0: i32) -> (i32, i32) {
    %c0_i32 = arith.constant 0 : i32
    %c0_i32_0 = arith.constant 0 : i32
    return %arg0, %c0_i32 : i32, i32
  }
  func.func @transform_2(%arg0: i32) -> (i32, i32) {
    %c0_i32 = arith.constant 0 : i32
    %c0_i32_0 = arith.constant 0 : i32
    return %arg0, %c0_i32 : i32, i32
  }
  func.func @transform_3(%arg0: i32) -> (i32, i32) {
    %c0_i32 = arith.constant 0 : i32
    %c0_i32_0 = arith.constant 0 : i32
    return %arg0, %c0_i32 : i32, i32
  }
}

</mosaic_0001>

<llo_original>
// kernel: custom-call.1
$region0: #{custom-call.1}
  %s0 = inlined_call_operand.hbm [shape: c64[2,4,16,16], index: 0, kind: input, shape index: {}]
  %s1 = inlined_call_operand.vmem [shape: f32[2,4,16,16], index: 1, kind: output, shape index: {}]
  %s2 = scalar_lea.hbm %s0, 2048
  $region1: #{custom-call.1} parent=0
    #allocation0 [shape = 's32[1]{0}', space=sflag, size = 0x4, scoped, tag = 'scoped memory for custom-call.1']
    %3 = vsyncpa [#allocation0], 0
    %s4 = sshll.u32 %s1, 4
    %s5 = int_to_ptr.vmem [resolvable:$true] %s4
    %7 = dma.hbm_to_vmem [thread:$0]  %s2, 2048, %s5, [#allocation0]
    %8 = dma.done [#allocation0], 2048
    %9 = vsyncpa [#allocation0], 1

// kernel: custom-call
$region0: #{custom-call}
  %s0 = inlined_call_operand.hbm [shape: c64[2,4,16,16], index: 0, kind: input, shape index: {}]
  %s1 = inlined_call_operand.vmem [shape: f32[2,4,16,16], index: 1, kind: output, shape index: {}]
  $region1: #{custom-call} parent=0
    #allocation0 [shape = 's32[1]{0}', space=sflag, size = 0x4, scoped, tag = 'scoped memory for custom-call']
    %2 = vsyncpa [#allocation0], 0
    %s3 = sshll.u32 %s1, 4
    %s4 = int_to_ptr.vmem [resolvable:$true] %s3
    %6 = dma.hbm_to_vmem [thread:$0]  %s0, 2048, %s4, [#allocation0]
    %7 = dma.done [#allocation0], 2048
    %8 = vsyncpa [#allocation0], 1

// kernel: custom-call.2
$region0: #{custom-call.2}
  %s0 = inlined_call_operand.vmem [shape: f32[2,4,16,16], index: 0, kind: input, shape index: {}]
  %s1 = inlined_call_operand.vmem [shape: f32[2,4,16,16], index: 1, kind: input, shape index: {}]
  %s2 = inlined_call_operand.hbm [shape: c64[2,4,16,16], index: 2, kind: output, shape index: {}]
  %s3 = scalar_lea.hbm %s2, 2048
  $region1: #{custom-call.2} parent=0
    #allocation0 [shape = 's32[1]{0}', space=sflag, size = 0x4, scoped, tag = 'scoped memory for custom-call.2']
    %4 = vsyncpa [#allocation0], 0
    %s5 = sshll.u32 %s0, 4
    %s6 = int_to_ptr.vmem [resolvable:$true] %s5
    %8 = dma.vmem_to_hbm [thread:$0]  %s6, 2048, %s2, [#allocation0]
    %9 = dma.done [#allocation0], 2048
    %10 = vsyncpa [#allocation0], 1
  $region2: #{custom-call.2} parent=0
    #allocation1 [shape = 's32[1]{0}', space=sflag, size = 0x4, scoped, tag = 'scoped memory for custom-call.2']
    %11 = vsyncpa [#allocation1], 0
    %s12 = sshll.u32 %s1, 4
    %s13 = int_to_ptr.vmem [resolvable:$true] %s12
    %15 = dma.vmem_to_hbm [thread:$0]  %s13, 2048, %s3, [#allocation1]
    %16 = dma.done [#allocation1], 2048
    %17 = vsyncpa [#allocation1], 1

// kernel: complex_relu.1
$region0: #{complex_relu.1}
  #allocation0 [shape = 'u32[]', space=smem, size = 0x4, offset = 0x4, fixed_abs, tag = 'smem constant byte address 0x4 - core index']
  #allocation1 [shape = 'u32[144,128]{1,0:T(1,128)}', space=vmem, size = 0x12000, scoped, tag = 'internal scratch']
  %s0 = inlined_call_operand.vmem [shape: f32[16,128], index: 0, kind: input, shape index: {}, may-alias: {0,2}]
  %s1 = inlined_call_operand.vmem [shape: f32[16,128], index: 1, kind: input, shape index: {}, may-alias: {1,3}]
  %s2 = inlined_call_operand.vmem [shape: f32[16,128], index: 2, kind: output, shape index: {0}, may-alias: {0,2}]
  %s3 = inlined_call_operand.vmem [shape: f32[16,128], index: 3, kind: output, shape index: {1}, may-alias: {1,3}]
  %4 = xla_tuple %s2, %s3
  %s5 = sld [smem:[#allocation0]]
  $region26: #{complex_relu.1} parent=0
    _
  %s7 = ssub.s32 1, %s5
  %s8 = scalar_select 0, %s7, %s5
  // Predicated region
  $region2: #{complex_relu.1} parent=0 // pred_check
    _
  $region3: #{complex_relu.1} parent=0 // pred_check_branch
    %10 = sbr.rel (0) target = $region5
  $region4: #{complex_relu.1} parent=0 // pred_region
    _
  $region5: #{complex_relu.1} parent=0 // pred_fallthru
    _
  // Predicated region
  $region6: #{complex_relu.1} parent=0 // pred_check
    _
  $region7: #{complex_relu.1} parent=0 // pred_check_branch
    %12 = sbr.rel (0) target = $region9
  $region8: #{complex_relu.1} parent=0 // pred_region
    _
  $region9: #{complex_relu.1} parent=0 // pred_fallthru
    _
  %v13 = vld [vmem:[%s0] sm:$0xff]
  %v14 = vld [vmem:[%s0 + $0x8] sm:$0xff]
  %v15 = vmax.f32 %v13, 0.0
  %v16 = vmax.f32 %v14, 0.0
  %17 = vst [vmem:[%s2] sm:$0xff] %v15
  %18 = vst [vmem:[%s2 + $0x8] sm:$0xff] %v16
  %v19 = vld [vmem:[%s1] sm:$0xff]
  %v20 = vld [vmem:[%s1 + $0x8] sm:$0xff]
  %v21 = vmax.f32 %v19, 0.0
  %v22 = vmax.f32 %v20, 0.0
  %23 = vst [vmem:[%s3] sm:$0xff] %v21
  %24 = vst [vmem:[%s3 + $0x8] sm:$0xff] %v22
  // Predicated region
  $region10: #{complex_relu.1} parent=0 // pred_check
    _
  $region11: #{complex_relu.1} parent=0 // pred_check_branch
    %26 = sbr.rel (0) target = $region13
  $region12: #{complex_relu.1} parent=0 // pred_region
    _
  $region13: #{complex_relu.1} parent=0 // pred_fallthru
    _
  // Predicated region
  $region14: #{complex_relu.1} parent=0 // pred_check
    _
  $region15: #{complex_relu.1} parent=0 // pred_check_branch
    %28 = sbr.rel (0) target = $region17
  $region16: #{complex_relu.1} parent=0 // pred_region
    _
  $region17: #{complex_relu.1} parent=0 // pred_fallthru
    _
  // Predicated region
  $region18: #{complex_relu.1} parent=0 // pred_check
    _
  $region19: #{complex_relu.1} parent=0 // pred_check_branch
    %30 = sbr.rel (0) target = $region21
  $region20: #{complex_relu.1} parent=0 // pred_region
    _
  $region21: #{complex_relu.1} parent=0 // pred_fallthru
    _
  // Predicated region
  $region22: #{complex_relu.1} parent=0 // pred_check
    _
  $region23: #{complex_relu.1} parent=0 // pred_check_branch
    %32 = sbr.rel (0) target = $region25
  $region24: #{complex_relu.1} parent=0 // pred_region
    _
  $region25: #{complex_relu.1} parent=0 // pred_fallthru
    _

</llo_original>
